<compile_context>
chip_gen: v5e
topology: v5e:2x2
jax: 0.10.0
libtpu: 0.0.40
codegen_flags: <defaults>
</compile_context>

<pallas_src>
import functools
import math

import jax
import jax.numpy as jnp
from jax.experimental import pallas as pl
from jax.experimental.pallas import tpu as pltpu

LANE = 128                            # output feature dim padded to lane width
VMEM_TILE_BUDGET = 24 * 1024 * 1024   # bytes of VMEM for streamed/resident tiles
VMEM_LIMIT_BYTES = 32 * 1024 * 1024   # scoped VMEM limit (safe on v5e/v6e/v7x)
TINY_FLOPS_THRESHOLD = 1_000_000      # below this, plain XLA dot beats a custom call


def _round_up(a, b):
    return ((a + b - 1) // b) * b


def popart_linear_kernel(x_ref, w_ref, b_ref, o_ref):
    # x_ref: [TILE_B, IN]; w_ref: [IN, OUT_pad] (pre-transposed, VMEM-resident);
    # b_ref: [1, OUT_pad] (resident); o_ref: [TILE_B, OUT_pad] (lane-dense -> vst).
    y = jnp.dot(x_ref[...], w_ref[...], preferred_element_type=jnp.float32)
    o_ref[...] = (y + b_ref[...]).astype(o_ref.dtype)


def prepare_popart_fast_params(weight, bias, *, store_dtype=jnp.float32):
    """One-time layout prep (hoisted out of the per-call path):
      - transpose weight to [IN, OUT]
      - pad OUT to a multiple of 128 lanes (unmasked full-vreg stores)
      - optional bf16 storage of the weight stream (f32 accumulation in-kernel).
    Returns (w_t, bias2d, out_features)."""
    out_features, in_features = weight.shape
    out_pad = _round_up(max(out_features, LANE), LANE)
    w_t = jnp.zeros((in_features, out_pad), jnp.float32)
    w_t = w_t.at[:, :out_features].set(weight.astype(jnp.float32).T)
    w_t = w_t.astype(store_dtype)
    bias2d = jnp.zeros((1, out_pad), jnp.float32)
    bias2d = bias2d.at[:, :out_features].set(bias.astype(jnp.float32))
    return w_t, bias2d, out_features


def _pick_tile_b(B, IN, OUT_pad, x_bytes):
    """Largest batch tile (multiple of 8) fitting the VMEM budget:
    double-buffered x tile + double-buffered out tile + resident (single-
    buffered) weight/bias.  For large B, keep >= 4 grid steps so the
    ("parallel",) batch axis spreads across both v7x TensorCores."""
    fixed = IN * OUT_pad * 4 + OUT_pad * 4            # weight + bias, 1 buffer each
    per_row = 2 * IN * x_bytes + 2 * OUT_pad * 4      # x (x2 bufs) + out (x2 bufs)
    tile_cap = max(8, ((VMEM_TILE_BUDGET - fixed) // per_row) // 8 * 8)
    tile_b = min(tile_cap, _round_up(B, 8))
    if B >= 1024:
        tile_b = min(tile_b, max(8, _round_up(pl.cdiv(B, 4), 8)))
    return tile_b


@functools.partial(
    jax.jit, static_argnames=("out_features", "force_pallas", "slice_output"))
def popart_forward(x, w_t, bias2d, out_features,
                   force_pallas=False, slice_output=True):
    """PopArt.forward: F.linear(x, weight, bias) with f32 accumulation."""
    x = x.astype(w_t.dtype)
    B, IN = x.shape
    OUT_pad = w_t.shape[1]

    tiny = (B * IN * OUT_pad) < TINY_FLOPS_THRESHOLD
    if tiny and not force_pallas:
        # Custom-call / pipeline fixed overhead dominates at these sizes;
        # XLA's fused dot is faster.
        y_pad = jnp.dot(x, w_t, preferred_element_type=jnp.float32) + bias2d
    else:
        tile_b = _pick_tile_b(B, IN, OUT_pad, x.dtype.itemsize)
        grid = (pl.cdiv(B, tile_b),)   # ragged last block: OOB output rows masked

        cost = pl.CostEstimate(
            flops=2 * B * IN * OUT_pad,
            transcendentals=0,
            bytes_accessed=(x.dtype.itemsize * B * IN            # x read once
                            + w_t.dtype.itemsize * IN * OUT_pad  # weight once
                            + 4 * OUT_pad                        # bias once
                            + 4 * B * OUT_pad),                  # output write
        )

        y_pad = pl.pallas_call(
            popart_linear_kernel,
            out_shape=jax.ShapeDtypeStruct((B, OUT_pad), jnp.float32),
            grid=grid,
            in_specs=[
                # Streamed batch tile (default double-buffered).
                pl.BlockSpec((tile_b, IN), lambda i: (i, 0)),
                # Invariant operands: single-buffered, VMEM-resident.
                pl.BlockSpec((IN, OUT_pad), lambda i: (0, 0),
                             pipeline_mode=pl.Buffered(1)),
                pl.BlockSpec((1, OUT_pad), lambda i: (0, 0),
                             pipeline_mode=pl.Buffered(1)),
            ],
            out_specs=pl.BlockSpec((tile_b, OUT_pad), lambda i: (i, 0)),
            compiler_params=pltpu.CompilerParams(
                dimension_semantics=("parallel",),   # shard batch across v7x TCs
                vmem_limit_bytes=VMEM_LIMIT_BYTES,
            ),
            cost_estimate=cost,
        )(x, w_t, bias2d)

    if slice_output:
        # Only the padded columns are trimmed (rows are already exactly B).
        # Hot-path callers can pass slice_output=False and index the first
        # out_features columns lazily to avoid one extra HBM round trip.
        return y_pad[:, :out_features]
    return y_pad


def init_popart_params(key, input_shape, output_shape):
    """Deterministic init matching PopArt.reset_parameters() distributions:
    kaiming_uniform_(a=sqrt(5)) -> U(-1/sqrt(fan_in), 1/sqrt(fan_in)) for both
    weight and bias."""
    kw, kb = jax.random.split(key)
    bound = 1.0 / math.sqrt(input_shape)
    weight = jax.random.uniform(
        kw, (output_shape, input_shape), jnp.float32, -bound, bound)
    bias = jax.random.uniform(kb, (output_shape,), jnp.float32, -bound, bound)
    # Non-trainable running stats (unused by forward, kept for completeness).
    stddev = jnp.ones((output_shape,), jnp.float32)
    mean = jnp.zeros((output_shape,), jnp.float32)
    mean_sq = jnp.zeros((output_shape,), jnp.float32)
    debiasing_term = jnp.zeros((), jnp.float32)
    # TODO(synk): update()/normalize()/denormalize()/record() are training-time
    # running-stat ops, not part of forward(); only forward() is a Pallas kernel.
    return dict(weight=weight, bias=bias, stddev=stddev, mean=mean,
                mean_sq=mean_sq, debiasing_term=debiasing_term)


if __name__ == "__main__":
    key = jax.random.PRNGKey(0)
    k_param, k_x1, k_x2 = jax.random.split(key, 3)

    INPUT_SHAPE = 32   # features
    OUTPUT_SHAPE = 16  # task / value heads
    BATCH = 8

    params = init_popart_params(k_param, INPUT_SHAPE, OUTPUT_SHAPE)
    # One-time layout prep (transpose + lane padding), hoisted out of the
    # per-step call path.  (Pass store_dtype=jnp.bfloat16 for the bf16 path.)
    w_t, bias2d, out_features = prepare_popart_fast_params(
        params["weight"], params["bias"])

    # 1) Small demo shape — force the Pallas path so the kernel itself is
    #    exercised (the dispatcher would otherwise use a plain XLA dot here).
    x = jax.random.normal(k_x1, (BATCH, INPUT_SHAPE), jnp.float32)
    y = popart_forward(x, w_t, bias2d, out_features, force_pallas=True)
    jax.block_until_ready(y)
    y_ref = x @ params["weight"].T + params["bias"]
    assert y.shape == (BATCH, OUTPUT_SHAPE)
    assert jnp.allclose(y, y_ref, atol=1e-4, rtol=1e-4)

    # 2) Larger ragged batch — exercises the natural dispatch, a multi-step
    #    parallel grid and the masked ragged last block (no pad / row slice).
    B2 = 1037
    x2 = jax.random.normal(k_x2, (B2, INPUT_SHAPE), jnp.float32)
    y2 = popart_forward(x2, w_t, bias2d, out_features)
    jax.block_until_ready(y2)
    y2_ref = x2 @ params["weight"].T + params["bias"]
    assert y2.shape == (B2, OUTPUT_SHAPE)
    assert jnp.allclose(y2, y2_ref, atol=1e-4, rtol=1e-4)

    print("KERNEL_OK")
</pallas_src>

<mosaic_0001>
module attributes {stable_mosaic.version = 11 : i64} {
  func.func @popart_linear_kernel(%arg0: i32, %arg1: memref<8x32xf32, #tpu.memory_space<vmem>>, %arg2: memref<32x128xf32, #tpu.memory_space<vmem>>, %arg3: memref<1x128xf32, #tpu.memory_space<vmem>>, %arg4: memref<8x128xf32, #tpu.memory_space<vmem>>) attributes {dimension_semantics = [#tpu.dimension_semantics<parallel>], iteration_bounds = array<i64: 1>, scalar_prefetch = 0 : i64, scratch_operands = 0 : i64, tpu.core_type = #tpu.core_type<tc>, window_params = [{transform_indices = @transform_0, window_bounds = array<i64: 8, 32>}, {pipeline_mode = #tpu.pipeline_mode<synchronous>, transform_indices = @transform_1, window_bounds = array<i64: 32, 128>}, {pipeline_mode = #tpu.pipeline_mode<synchronous>, transform_indices = @transform_2, window_bounds = array<i64: 1, 128>}, {transform_indices = @transform_3, window_bounds = array<i64: 8, 128>}]} {
    %c0 = arith.constant 0 : index
    %c0_0 = arith.constant 0 : index
    %0 = vector.load %arg1[%c0, %c0_0] : memref<8x32xf32, #tpu.memory_space<vmem>>, vector<8x32xf32>
    %c0_1 = arith.constant 0 : index
    %c0_2 = arith.constant 0 : index
    %1 = vector.load %arg2[%c0_1, %c0_2] : memref<32x128xf32, #tpu.memory_space<vmem>>, vector<32x128xf32>
    %cst = arith.constant dense<0.000000e+00> : vector<8x128xf32>
    %2 = tpu.matmul %0, %1, %cst {dimension_numbers = #tpu.dot_dimension_numbers<[1], [0], [0], [1], [0, 0, 1, 1], [], []>} : vector<8x32xf32>, vector<32x128xf32>, vector<8x128xf32> -> vector<8x128xf32>
    %c0_3 = arith.constant 0 : index
    %c0_4 = arith.constant 0 : index
    %3 = vector.load %arg3[%c0_3, %c0_4] : memref<1x128xf32, #tpu.memory_space<vmem>>, vector<1x128xf32>
    %4 = vector.broadcast %3 : vector<1x128xf32> to vector<8x128xf32>
    %5 = arith.addf %2, %4 : vector<8x128xf32>
    %c0_5 = arith.constant 0 : index
    %c0_6 = arith.constant 0 : index
    %6 = vector.load %arg4[%c0_5, %c0_6] : memref<8x128xf32, #tpu.memory_space<vmem>>, vector<8x128xf32>
    tpu.vector_store %arg4[%c0_5, %c0_6], %5 {strides = array<i32>} : memref<8x128xf32, #tpu.memory_space<vmem>>, vector<8x128xf32>,
    return
  }
  func.func @transform_0(%arg0: i32) -> (i32, i32) {
    %c0_i32 = arith.constant 0 : i32
    %c0_i32_0 = arith.constant 0 : i32
    return %arg0, %c0_i32 : i32, i32
  }
  func.func @transform_1(%arg0: i32) -> (i32, i32) {
    %c0_i32 = arith.constant 0 : i32
    %c0_i32_0 = arith.constant 0 : i32
    %c0_i32_1 = arith.constant 0 : i32
    return %c0_i32, %c0_i32_0 : i32, i32
  }
  func.func @transform_2(%arg0: i32) -> (i32, i32) {
    %c0_i32 = arith.constant 0 : i32
    %c0_i32_0 = arith.constant 0 : i32
    %c0_i32_1 = arith.constant 0 : i32
    return %c0_i32, %c0_i32_0 : i32, i32
  }
  func.func @transform_3(%arg0: i32) -> (i32, i32) {
    %c0_i32 = arith.constant 0 : i32
    %c0_i32_0 = arith.constant 0 : i32
    return %arg0, %c0_i32 : i32, i32
  }
}

</mosaic_0001>

<llo_original>
// kernel: popart_forward.1
$region0: #{popart_forward.1}
  #allocation0 [shape = 'u32[]', space=smem, size = 0x4, offset = 0x4, fixed_abs, tag = 'smem constant byte address 0x4 - core index']
  #allocation1 [shape = 'u32[72,128]{1,0:T(1,128)}', space=vmem, size = 0x9000, scoped, tag = 'internal scratch']
  %s0 = inlined_call_operand.hbm [shape: f32[8,32], index: 0, kind: input, shape index: {}]
  %s1 = inlined_call_operand.hbm [shape: f32[32,128], index: 1, kind: input, shape index: {}]
  %s2 = inlined_call_operand.vmem [shape: f32[1,128], index: 2, kind: input, shape index: {}]
  %s3 = inlined_call_operand.hbm [shape: f32[8,128], index: 3, kind: output, shape index: {}]
  %s4 = sld [smem:[#allocation0]]
  $region30: #{popart_forward.1} parent=0
    _
  %s6 = ssub.s32 1, %s4
  %s7 = scalar_select 0, %s6, %s4
  $region1: #{popart_forward.1} parent=0
    #allocation2 [shape = 'u8[4096]{0}', space=vmem, size = 0x1000, scoped, tag = 'input window, operand 0, single buffered']
    #allocation3 [shape = 's32[1]{0}', space=sflag, size = 0x4, scoped, tag = 'scoped memory for popart_forward.1']
    #allocation4 [shape = 's32[1]{0}', space=sflag, size = 0x4, scoped, tag = 'scoped memory for popart_forward.1']
    #allocation5 [shape = 'u8[16384]{0}', space=vmem, size = 0x4000, scoped, tag = 'input window, operand 1, single buffered']
    #allocation6 [shape = 's32[1]{0}', space=sflag, size = 0x4, scoped, tag = 'scoped memory for popart_forward.1']
    #allocation7 [shape = 'u8[4096]{0}', space=vmem, size = 0x1000, scoped, tag = 'output window, operand 0, single buffered']
    %8 = vsyncpa [#allocation3], 0
    %9 = vsyncpa [#allocation6], 0
    %10 = vsyncpa [#allocation4], 0
    // Predicated region
    $region2: #{popart_forward.1} parent=1 // pred_check
      _
    $region3: #{popart_forward.1} parent=1 // pred_check_branch
      %12 = sbr.rel (0) target = $region5
    $region4: #{popart_forward.1} parent=1 // pred_region
      %14 = vsyncadd [#allocation3], 0
      %s16 = sshll.u32 %s0, 4
      %s17 = int_to_ptr.hbm [resolvable:$true] %s16
      %s18 = sshll.u32 [#allocation2], 4
      %s19 = int_to_ptr.vmem [resolvable:$true] %s18
      %21 = dma.hbm_to_vmem [thread:$0]  %s17, 128, %s19, [#allocation3]
    $region5: #{popart_forward.1} parent=1 // pred_fallthru
      _
    // Predicated region
    $region6: #{popart_forward.1} parent=1 // pred_check
      _
    $region7: #{popart_forward.1} parent=1 // pred_check_branch
      %23 = sbr.rel (0) target = $region9
    $region8: #{popart_forward.1} parent=1 // pred_region
      %25 = vsyncadd [#allocation6], 0
      %s26 = sshll.u32 %s1, 4
      %s27 = int_to_ptr.hbm [resolvable:$true] %s26
      %s28 = sshll.u32 [#allocation5], 4
      %s29 = int_to_ptr.vmem [resolvable:$true] %s28
      %34 = dma.hbm_to_vmem [thread:$0]  %s27, 512, %s29, [#allocation6], 128, 128, 8
    $region9: #{popart_forward.1} parent=1 // pred_fallthru
      _
    // Predicated region
    $region10: #{popart_forward.1} parent=1 // pred_check
      _
    $region11: #{popart_forward.1} parent=1 // pred_check_branch
      %36 = sbr.rel (0) target = $region13
    $region12: #{popart_forward.1} parent=1 // pred_region
      _
    $region13: #{popart_forward.1} parent=1 // pred_fallthru
      _
    // Predicated region
    $region14: #{popart_forward.1} parent=1 // pred_check
      _
    $region15: #{popart_forward.1} parent=1 // pred_check_branch
      %38 = sbr.rel (0) target = $region17
    $region16: #{popart_forward.1} parent=1 // pred_region
      %40 = dma.done [#allocation3], 128
    $region17: #{popart_forward.1} parent=1 // pred_fallthru
      _
    // Predicated region
    $region18: #{popart_forward.1} parent=1 // pred_check
      _
    $region19: #{popart_forward.1} parent=1 // pred_check_branch
      %42 = sbr.rel (0) target = $region21
    $region20: #{popart_forward.1} parent=1 // pred_region
      %44 = dma.done [#allocation6], 512
    $region21: #{popart_forward.1} parent=1 // pred_fallthru
      _
    %v45 = vld [vmem:[#allocation2] sm:$0xff]
    %v46 = vld [vmem:[#allocation5] sm:$0xff]
    %v47 = vld [vmem:[#allocation5 + $0x8] sm:$0xff]
    %v48 = vld [vmem:[#allocation5 + $0x10] sm:$0xff]
    %v49 = vld [vmem:[#allocation5 + $0x18] sm:$0xff]
    %v50 = vld [vmem:[%s2] sm:$0x1]
    %v52 = vperm.slane %v50, 0
    %vm54 = vcmask 261120
    %v56 = vsel %vm54, %v45, 0
    %58 = vmatpush.msra.mxu0 0.0
    %59 = vmatpush.msra.mxu0 0.0
    %60 = vmatpush.msra.mxu0 0.0
    %61 = vmatpush.msra.mxu0 0.0
    %62 = vmatpush.msra.mxu0 0.0
    %63 = vmatpush.msra.mxu0 0.0
    %64 = vmatpush.msra.mxu0 0.0
    %65 = vmatpush.msra.mxu0 0.0
    %66 = vmatpush.msra.mxu0 0.0
    %67 = vmatpush.msra.mxu0 0.0
    %68 = vmatpush.msra.mxu0 0.0
    %69 = vmatpush.msra.mxu0 0.0
    %70 = vmatpush.msra.mxu0 %v49
    %71 = vmatpush.msra.mxu0 %v48
    %72 = vmatpush.msra.mxu0 %v47
    %73 = vmatpush.msra.mxu0 %v46
    %74 = vmatmul.f32.gmra.mxu0 %v56
    %v75 = vpop.f32.mrf.mxu0
    %v76 = vadd.f32 %v52, %v75
    %77 = vdwg.mxu0
    %78 = vst [vmem:[#allocation7] sm:$0xff] %v76
    // Predicated region
    $region22: #{popart_forward.1} parent=1 // pred_check
      _
    $region23: #{popart_forward.1} parent=1 // pred_check_branch
      %80 = sbr.rel (0) target = $region25
    $region24: #{popart_forward.1} parent=1 // pred_region
      %82 = vsyncadd [#allocation4], 0
      %s84 = sshll.u32 [#allocation7], 4
      %s85 = int_to_ptr.vmem [resolvable:$true] %s84
      %s86 = sshll.u32 %s3, 4
      %s87 = int_to_ptr.hbm [resolvable:$true] %s86
      %89 = dma.vmem_to_hbm [thread:$0]  %s85, 128, %s87, [#allocation4]
    $region25: #{popart_forward.1} parent=1 // pred_fallthru
      _
    // Predicated region
    $region26: #{popart_forward.1} parent=1 // pred_check
      _
    $region27: #{popart_forward.1} parent=1 // pred_check_branch
      %91 = sbr.rel (0) target = $region29
    $region28: #{popart_forward.1} parent=1 // pred_region
      %93 = dma.done [#allocation4], 128
    $region29: #{popart_forward.1} parent=1 // pred_fallthru
      _
    %94 = vsyncpa [#allocation3], 1
    %95 = vsyncpa [#allocation6], 1
    %96 = vsyncpa [#allocation4], 1

</llo_original>
